<compile_context>
chip_gen: v7x
topology: tpu7x:2x2x1
jax: 0.10.0
libtpu: 0.0.40
codegen_flags: <defaults>
</compile_context>

<pallas_src>
import jax
import jax.numpy as jnp
from jax.experimental import pallas as pl
from jax.experimental.pallas import tpu as pltpu


def _patch_embed_kernel(patch_ref, w_ref, add_ref, o_ref):
    # patch_ref: (TM, d_in)    bf16 flattened patches (CLS slots are zero rows)
    # w_ref:     (d_in, hidden) bf16 projection weight (torch weight^T), resident
    # add_ref:   (TM, hidden)  bf16 additive stream (pos + bias, or cls + pos0)
    # o_ref:     (TM, hidden)  output tile
    acc = jnp.dot(patch_ref[...], w_ref[...],
                  preferred_element_type=jnp.float32)
    o_ref[...] = (acc + add_ref[...].astype(jnp.float32)).astype(o_ref.dtype)


def patchify_jax(x, p):
    """(b, h, w, c) -> (b, h*w/p^2, p*p*c), matching the torch patchify."""
    b, h, w, c = x.shape
    x = x.reshape(b, h // p, p, w // p, p, c)
    x = jnp.transpose(x, (0, 1, 3, 2, 4, 5))          # (b, h/p, w/p, p, p, c)
    return x.reshape(b, (h // p) * (w // p), p * p * c)


def _choose_tm(m):
    """Row-tile size: <=512, multiple of 8, prefer divisors of m, >=2 tiles."""
    if m % 8 != 0 or m <= 16:
        return m                       # tiny / unaligned: one full block (legal)
    cap = min(512, max(8, (m // 2 // 8) * 8))   # >= 2 row tiles (v7x megacore)
    best = None
    for tm in range(cap, 7, -8):
        if m % tm == 0:                # exact divisor -> no partial last block
            best = tm
            break
    if best is not None and best >= 128:
        return best
    return cap                         # accept a masked partial trailing block


def patch_embeddings(x, params, p, out_dtype=jnp.float32):
    """Forward pass of PatchEmbeddings (dropout = identity)."""
    w = params["w"]                           # (d_in, hidden) = torch weight^T
    bias = params["b"]                        # (hidden,)
    cls_token = params["cls_token"]           # (b, 1, hidden)
    pos_embedding = params["pos_embedding"]   # (b, n+1, hidden)

    b, h, wdt, c = x.shape
    n = (h * wdt) // (p * p)
    d_in = p * p * c
    hidden = w.shape[1]
    rows = n + 1                              # CLS row folded into the kernel
    m = b * rows

    # bf16 operand streams (MXU-native, halves HBM bytes); f32 accumulate.
    patches = patchify_jax(x.astype(jnp.bfloat16), p)           # (b, n, d_in)
    # CLS fold: one zero patch row per batch -> the matmul emits exactly 0 for
    # that row; its additive entry carries cls_token + pos[:, 0] (no bias).
    zero_row = jnp.zeros((b, 1, d_in), dtype=jnp.bfloat16)
    patches = jnp.concatenate([zero_row, patches], axis=1).reshape(m, d_in)

    w_bf16 = w.astype(jnp.bfloat16)

    add_cls = cls_token + pos_embedding[:, :1, :]                # (b, 1, hidden)
    add_patch = pos_embedding[:, 1:, :] + bias.reshape(1, 1, hidden)
    additive = jnp.concatenate([add_cls, add_patch], axis=1)     # (b, n+1, hidden)
    additive = additive.reshape(m, hidden).astype(jnp.bfloat16)

    tm = _choose_tm(m)
    grid = (pl.cdiv(m, tm),)

    # Rough double-buffered VMEM working set; raise the scoped limit only when
    # we'd exceed the smallest default (v5e: 16 MiB), capped for v7x's 64 MiB.
    out_bytes = jnp.dtype(out_dtype).itemsize
    vmem_est = (2 * tm * d_in * 2          # patches (bf16, double-buffered)
                + d_in * hidden * 2        # weight (bf16, grid-invariant)
                + 2 * tm * hidden * 2      # additive (bf16, double-buffered)
                + 2 * tm * hidden * out_bytes)
    cp_kwargs = dict(dimension_semantics=("parallel",))
    if vmem_est > 12 * 2**20:
        cp_kwargs["vmem_limit_bytes"] = int(min(2 * vmem_est, 48 * 2**20))

    out = pl.pallas_call(
        _patch_embed_kernel,
        out_shape=jax.ShapeDtypeStruct((m, hidden), out_dtype),
        grid_spec=pltpu.PrefetchScalarGridSpec(
            num_scalar_prefetch=0,
            grid=grid,
            in_specs=[
                pl.BlockSpec((tm, d_in), lambda i: (i, 0)),
                pl.BlockSpec((d_in, hidden), lambda i: (0, 0)),  # grid-invariant
                pl.BlockSpec((tm, hidden), lambda i: (i, 0)),
            ],
            out_specs=pl.BlockSpec((tm, hidden), lambda i: (i, 0)),
        ),
        compiler_params=pltpu.CompilerParams(**cp_kwargs),
    )(patches, w_bf16, additive)

    return out.reshape(b, rows, hidden)


def _reference(x, params, p):
    """Pure-JAX f32 reference matching the torch module."""
    patches = patchify_jax(x, p)
    proj = jnp.einsum("bnd,dh->bnh", patches, params["w"]) + params["b"]
    out = jnp.concatenate([params["cls_token"], proj], axis=1)
    return out + params["pos_embedding"]


def _make_inputs(key, b, h, w_, c, p, hidden):
    n = (h * w_) // (p * p)
    d_in = p * p * c
    kx, kw, kb, kc, kp = jax.random.split(key, 5)
    x = jax.random.normal(kx, (b, h, w_, c), dtype=jnp.float32)
    params = {
        # torch nn.Linear(d_in, hidden): weight (hidden, d_in); we store W^T.
        "w": jax.random.normal(kw, (d_in, hidden), dtype=jnp.float32) * 0.02,
        "b": jax.random.normal(kb, (hidden,), dtype=jnp.float32) * 0.02,
        "cls_token": jax.random.normal(kc, (b, 1, hidden), dtype=jnp.float32),
        # torch init is zeros; small randoms so the add path is exercised.
        "pos_embedding": jax.random.normal(
            kp, (b, n + 1, hidden), dtype=jnp.float32) * 0.01,
    }
    return x, params, n


if __name__ == "__main__":
    fwd = jax.jit(patch_embeddings, static_argnums=(2,))
    key = jax.random.PRNGKey(0)
    k1, k2 = jax.random.split(key)

    # Case 1: small shapes consistent with the module (single full-block tile).
    b, h, w_, c, p, hidden = 2, 16, 16, 4, 4, 32
    x, params, n = _make_inputs(k1, b, h, w_, c, p, hidden)
    out = jax.block_until_ready(fwd(x, params, p))
    assert out.shape == (b, n + 1, hidden)
    ref = _reference(x, params, p)
    # bf16 matmul / additive operands -> bf16-level tolerance.
    assert jnp.allclose(out, ref, atol=5e-2, rtol=5e-2), "mismatch vs reference (case 1)"

    # Case 2: exercises the multi-tile row grid + masked partial last block.
    b, h, w_, c, p, hidden = 8, 16, 16, 4, 4, 128
    x, params, n = _make_inputs(k2, b, h, w_, c, p, hidden)
    out = jax.block_until_ready(fwd(x, params, p))
    assert out.shape == (b, n + 1, hidden)
    ref = _reference(x, params, p)
    assert jnp.allclose(out, ref, atol=5e-2, rtol=5e-2), "mismatch vs reference (case 2)"

    print("KERNEL_OK")
</pallas_src>

<mosaic_0001>
module attributes {stable_mosaic.version = 11 : i64} {
  func.func @_patch_embed_kernel(%arg0: i32, %arg1: memref<34x64xbf16, #tpu.memory_space<vmem>>, %arg2: memref<64x32xbf16, #tpu.memory_space<vmem>>, %arg3: memref<34x32xbf16, #tpu.memory_space<vmem>>, %arg4: memref<34x32xf32, #tpu.memory_space<vmem>>) attributes {dimension_semantics = [#tpu.dimension_semantics<parallel>], iteration_bounds = array<i64: 1>, scalar_prefetch = 0 : i64, scratch_operands = 0 : i64, tpu.core_type = #tpu.core_type<tc>, window_params = [{transform_indices = @transform_0, window_bounds = array<i64: 34, 64>}, {pipeline_mode = #tpu.pipeline_mode<synchronous>, transform_indices = @transform_1, window_bounds = array<i64: 64, 32>}, {transform_indices = @transform_2, window_bounds = array<i64: 34, 32>}, {transform_indices = @transform_3, window_bounds = array<i64: 34, 32>}]} {
    %c0 = arith.constant 0 : index
    %c0_0 = arith.constant 0 : index
    %0 = vector.load %arg1[%c0, %c0_0] : memref<34x64xbf16, #tpu.memory_space<vmem>>, vector<34x64xbf16>
    %c0_1 = arith.constant 0 : index
    %c0_2 = arith.constant 0 : index
    %1 = vector.load %arg2[%c0_1, %c0_2] : memref<64x32xbf16, #tpu.memory_space<vmem>>, vector<64x32xbf16>
    %cst = arith.constant dense<0.000000e+00> : vector<34x32xf32>
    %2 = tpu.matmul %0, %1, %cst {dimension_numbers = #tpu.dot_dimension_numbers<[1], [0], [0], [1], [0, 0, 1, 1], [], []>} : vector<34x64xbf16>, vector<64x32xbf16>, vector<34x32xf32> -> vector<34x32xf32>
    %c0_3 = arith.constant 0 : index
    %c0_4 = arith.constant 0 : index
    %3 = vector.load %arg3[%c0_3, %c0_4] : memref<34x32xbf16, #tpu.memory_space<vmem>>, vector<34x32xbf16>
    %4 = arith.extf %3 : vector<34x32xbf16> to vector<34x32xf32>
    %5 = arith.addf %2, %4 : vector<34x32xf32>
    %c0_5 = arith.constant 0 : index
    %c0_6 = arith.constant 0 : index
    %6 = vector.load %arg4[%c0_5, %c0_6] : memref<34x32xf32, #tpu.memory_space<vmem>>, vector<34x32xf32>
    tpu.vector_store %arg4[%c0_5, %c0_6], %5 {strides = array<i32>} : memref<34x32xf32, #tpu.memory_space<vmem>>, vector<34x32xf32>,
    return
  }
  func.func @transform_0(%arg0: i32) -> (i32, i32) {
    %c0_i32 = arith.constant 0 : i32
    %c0_i32_0 = arith.constant 0 : i32
    return %arg0, %c0_i32 : i32, i32
  }
  func.func @transform_1(%arg0: i32) -> (i32, i32) {
    %c0_i32 = arith.constant 0 : i32
    %c0_i32_0 = arith.constant 0 : i32
    %c0_i32_1 = arith.constant 0 : i32
    return %c0_i32, %c0_i32_0 : i32, i32
  }
  func.func @transform_2(%arg0: i32) -> (i32, i32) {
    %c0_i32 = arith.constant 0 : i32
    %c0_i32_0 = arith.constant 0 : i32
    return %arg0, %c0_i32 : i32, i32
  }
  func.func @transform_3(%arg0: i32) -> (i32, i32) {
    %c0_i32 = arith.constant 0 : i32
    %c0_i32_0 = arith.constant 0 : i32
    return %arg0, %c0_i32 : i32, i32
  }
}

</mosaic_0001>

<llo_original>
// kernel: patch_embeddings.1
$region0: #{patch_embeddings.1}
  #allocation0 [shape = 'u32[]', space=smem, size = 0x4, offset = 0x4, fixed_abs, tag = 'smem constant byte address 0x4 - core index']
  #allocation1 [shape = 'u32[144,128]{1,0:T(1,128)}', space=vmem, size = 0x12000, scoped, tag = 'internal scratch']
  %s0 = inlined_call_operand.vmem [shape: bf16[34,64], index: 0, kind: input, shape index: {}]
  %s1 = inlined_call_operand.vmem [shape: bf16[64,32], index: 1, kind: input, shape index: {}]
  %s2 = inlined_call_operand.vmem [shape: bf16[34,32], index: 2, kind: input, shape index: {}]
  %s3 = inlined_call_operand.vmem [shape: f32[34,32], index: 3, kind: output, shape index: {}]
  %s4 = sld [smem:[#allocation0]]
  $region22: #{patch_embeddings.1} parent=0
    _
  %s6 = ssub.s32 1, %s4
  %s7 = scalar_select 0, %s6, %s4
  // Predicated region
  $region2: #{patch_embeddings.1} parent=0 // pred_check
    _
  $region3: #{patch_embeddings.1} parent=0 // pred_check_branch
    %9 = sbr.rel (0) target = $region5
  $region4: #{patch_embeddings.1} parent=0 // pred_region
    _
  $region5: #{patch_embeddings.1} parent=0 // pred_fallthru
    _
  // Predicated region
  $region6: #{patch_embeddings.1} parent=0 // pred_check
    _
  $region7: #{patch_embeddings.1} parent=0 // pred_check_branch
    %11 = sbr.rel (0) target = $region9
  $region8: #{patch_embeddings.1} parent=0 // pred_region
    _
  $region9: #{patch_embeddings.1} parent=0 // pred_fallthru
    _
  // Predicated region
  $region10: #{patch_embeddings.1} parent=0 // pred_check
    _
  $region11: #{patch_embeddings.1} parent=0 // pred_check_branch
    %13 = sbr.rel (0) target = $region13
  $region12: #{patch_embeddings.1} parent=0 // pred_region
    _
  $region13: #{patch_embeddings.1} parent=0 // pred_fallthru
    _
  %v15 = vld [vmem:[%s0] sm:$0xf]
  %v16 = vld [vmem:[%s0 + $0x4] sm:$0xf]
  %v17 = vld [vmem:[%s0 + $0x8] sm:$0xf]
  %v18 = vld [vmem:[%s0 + $0xc] sm:$0xf]
  %v19 = vld [vmem:[%s0 + $0x10] sm:$0x1]
  %v20 = vld [vmem:[%s1] sm:$0xf]
  %v21 = vld [vmem:[%s1 + $0x4] sm:$0xf]
  %v22 = vld [vmem:[%s1 + $0x8] sm:$0xf]
  %v23 = vld [vmem:[%s1 + $0xc] sm:$0xf]
  %v24 = vld [vmem:[%s1 + $0x10] sm:$0xf]
  %v25 = vld [vmem:[%s1 + $0x14] sm:$0xf]
  %v26 = vld [vmem:[%s1 + $0x18] sm:$0xf]
  %v27 = vld [vmem:[%s1 + $0x1c] sm:$0xf]
  %v28 = vld [vmem:[%s2] sm:$0xf]
  %v29 = vld [vmem:[%s2 + $0x4] sm:$0xf]
  %v30 = vld [vmem:[%s2 + $0x8] sm:$0xf]
  %v31 = vld [vmem:[%s2 + $0xc] sm:$0xf]
  %v32 = vld [vmem:[%s2 + $0x10] sm:$0x1]
  %v33 = vunpack.c.l.bf16 %v28
  %v34 = vunpack.c.l.bf16 %v29
  %v35 = vunpack.c.l.bf16 %v30
  %v36 = vunpack.c.l.bf16 %v31
  %v37 = vunpack.c.l.bf16 %v32
  %v43 = vunpack.c.l.b16 %v15
  %v44 = vunpack.c.l.b16 %v16
  %v45 = vunpack.c.l.b16 %v17
  %v46 = vunpack.c.l.b16 %v18
  %v47 = vunpack.c.l.b16 %v19
  %v48 = vpack.c.b16 %v44, %v43
  %v49 = vpack.c.b16 %v46, %v45
  %v50 = vpack.c.b16 %v47, %v47
  %v59 = vunpack.c.l.b16 %v20
  %v60 = vunpack.c.l.b16 %v21
  %v61 = vunpack.c.l.b16 %v22
  %v62 = vunpack.c.l.b16 %v23
  %v63 = vunpack.c.l.b16 %v24
  %v64 = vunpack.c.l.b16 %v25
  %v65 = vunpack.c.l.b16 %v26
  %v66 = vunpack.c.l.b16 %v27
  %v67 = vpack.c.b16 %v60, %v59
  %v68 = vpack.c.b16 %v62, %v61
  %v69 = vpack.c.b16 %v64, %v63
  %v70 = vpack.c.b16 %v66, %v65
  %vm75 = vcmask 523264
  %v77 = vsel %vm75, %v48, 0
  %v80 = vsel %vm75, %v49, 0
  %v83 = vsel %vm75, %v50, 0
  %85 = vmatprep.subr.bf16.mxu0 0
  %86 = vmatpush1.bf16.msra.mxu0 %v67
  %87 = vmatprep.subr.bf16.mxu0 0
  %88 = vmatpush1.bf16.msra.mxu0 %v68
  %89 = vmatprep.subr.bf16.mxu0 0
  %90 = vmatpush1.bf16.msra.mxu0 %v69
  %91 = vmatprep.subr.bf16.mxu0 0
  %92 = vmatpush1.bf16.msra.mxu0 %v70
  %93 = vmatprep.subr.bf16.mxu0 0
  %94 = vmatpush1.bf16.msra.mxu0 0
  %95 = vmatprep.subr.bf16.mxu0 0
  %96 = vmatpush1.bf16.msra.mxu0 0
  %97 = vmatprep.subr.bf16.mxu0 0
  %98 = vmatpush1.bf16.msra.mxu0 0
  %99 = vmatprep.subr.bf16.mxu0 0
  %100 = vmatpush1.bf16.msra.mxu0 0
  %101 = vmatprep.subr.bf16.mxu0 0
  %102 = vmatpush1.bf16.msra.mxu0 0
  %103 = vmatprep.subr.bf16.mxu0 0
  %104 = vmatpush1.bf16.msra.mxu0 0
  %105 = vmatprep.subr.bf16.mxu0 0
  %106 = vmatpush1.bf16.msra.mxu0 0
  %107 = vmatprep.subr.bf16.mxu0 0
  %108 = vmatpush1.bf16.msra.mxu0 0
  %109 = vmatprep.subr.bf16.mxu0 0
  %110 = vmatpush1.bf16.msra.mxu0 0
  %111 = vmatprep.subr.bf16.mxu0 0
  %112 = vmatpush1.bf16.msra.mxu0 0
  %113 = vmatprep.subr.bf16.mxu0 0
  %114 = vmatpush1.bf16.msra.mxu0 0
  %115 = vmatprep.subr.bf16.mxu0 0
  %116 = vmatpush1.bf16.msra.mxu0 0
  %117 = vmatprep.mubr.bf16.mxu0 0
  %118 = vmatmul.mubr.bf16.gmra.mrb[0].mxu0 %v77
  %v119 = vpop.f32.mrb[0].mxu0
  %v120 = vadd.f32 %v33, %v119
  %v121 = vpop.f32.mrb[0].mxu0
  %v122 = vpop.f32.mrb[0].mxu0
  %v123 = vadd.f32 %v34, %v122
  %v124 = vpop.f32.mrb[0].mxu0
  %125 = vmatprep.mubr.bf16.mxu0 0
  %126 = vmatmul.mubr.bf16.gmra.mrb[0].mxu0 %v80
  %v127 = vpop.f32.mrb[0].mxu0
  %v128 = vadd.f32 %v35, %v127
  %v129 = vpop.f32.mrb[0].mxu0
  %v130 = vpop.f32.mrb[0].mxu0
  %v131 = vadd.f32 %v36, %v130
  %v132 = vpop.f32.mrb[0].mxu0
  %133 = vmatprep.mubr.bf16.mxu0 0
  %134 = vmatmul.mubr.bf16.gmra.mrb[0].mxu0 %v83
  %v135 = vpop.f32.mrb[0].mxu0
  %v136 = vadd.f32 %v37, %v135
  %v137 = vpop.f32.mrb[0].mxu0
  %v138 = vpop.f32.mrb[0].mxu0
  %v139 = vpop.f32.mrb[0].mxu0
  %140 = vdwg.mxu0
  %vm141 = vcmask 261120
  %142 = vst.msk [vmem:[%s3] sm:$0xff] %vm141, %v120
  %143 = vst.msk [vmem:[%s3 + $0x8] sm:$0xff] %vm141, %v123
  %144 = vst.msk [vmem:[%s3 + $0x10] sm:$0xff] %vm141, %v128
  %145 = vst.msk [vmem:[%s3 + $0x18] sm:$0xff] %vm141, %v131
  %vm146 = vcmask 254976
  %147 = vst.msk [vmem:[%s3 + $0x20] sm:$0x3] %vm146, %v136
  // Predicated region
  $region14: #{patch_embeddings.1} parent=0 // pred_check
    _
  $region15: #{patch_embeddings.1} parent=0 // pred_check_branch
    %149 = sbr.rel (0) target = $region17
  $region16: #{patch_embeddings.1} parent=0 // pred_region
    _
  $region17: #{patch_embeddings.1} parent=0 // pred_fallthru
    _
  // Predicated region
  $region18: #{patch_embeddings.1} parent=0 // pred_check
    _
  $region19: #{patch_embeddings.1} parent=0 // pred_check_branch
    %151 = sbr.rel (0) target = $region21
  $region20: #{patch_embeddings.1} parent=0 // pred_region
    _
  $region21: #{patch_embeddings.1} parent=0 // pred_fallthru
    _

</llo_original>
